<compile_context>
chip_gen: v7x
topology: tpu7x:2x2x1
jax: 0.10.0
libtpu: 0.0.40
codegen_flags: <defaults>
</compile_context>

<pallas_src>
import functools

import numpy as np
import jax
import jax.numpy as jnp
from jax.experimental import pallas as pl
from jax.experimental.pallas import tpu as pltpu


def attention_kernel(lens_ref, x_ref, w_ih_t_ref, w_hh_ref, out_ref, h_scr,
                     *, time_chunk):
    # lens_ref:   (Bt, 1)    int32  -- source lengths for this batch tile
    # x_ref:      (Bt, T, E) f32    -- batch-first sequence tile
    # w_ih_t_ref: (E, 4)     f32    -- transpose of torch weight_ih_l0 (gates i,f,g,o)
    # w_hh_ref:   (4, 1)     f32    -- torch weight_hh_l0
    # out_ref:    (Bt, T, E) f32
    # h_scr:      (T, Bt)    f32 VMEM scratch -- per-timestep hidden states,
    #                                            batch on the 128-lane axis
    Bt, T, E = x_ref.shape
    w_ih_t = w_ih_t_ref[...]                                   # (E, 4)
    # Hoisted recurrent-weight broadcast (JAX does not CSE broadcast_in_dim).
    w_hh_b = jnp.broadcast_to(w_hh_ref[...], (4, Bt))          # (4, Bt)

    h = jnp.zeros((1, Bt), jnp.float32)
    c = jnp.zeros((1, Bt), jnp.float32)

    # Input projection hoisted per time chunk: one MXU matmul per chunk keeps
    # the MXU batched while bounding the live gate-slab footprint at large Bt.
    for c0 in range(0, T, time_chunk):
        tc = min(time_chunk, T - c0)
        xc = x_ref[:, pl.ds(c0, tc), :]                        # (Bt, tc, E)
        zc = jnp.dot(xc.reshape(Bt * tc, E), w_ih_t,
                     preferred_element_type=jnp.float32).reshape(Bt, tc, 4)

        # Serial recurrence: batch on lanes -> every op below is lane-dense.
        for dt in range(tc):
            t = c0 + dt
            # (Bt, 4) -> (4, Bt): one small XLU transpose per step, off the
            # VALU/EUP slots and independent of the h/c dependency chain.
            z = jnp.transpose(zc[:, dt, :]) + h * w_hh_b       # (4, Bt)
            sig = 0.5 * (jnp.tanh(0.5 * z) + 1.0)              # sigmoid(z), 1 EUP push
            i_g = sig[0:1, :]
            f_g = sig[1:2, :]
            o_g = sig[3:4, :]
            g_g = jnp.tanh(z[2:3, :])                          # tanh only on g gate
            c = f_g * c + i_g * g_g
            h = o_g * jnp.tanh(c)                              # (1, Bt)
            h_scr[t:t + 1, :] = h                              # full-row store

    # Masked softmax over time (dim=1 of the original layout).
    # Finite -1e30 mask: exp underflows to exactly 0, matching -inf masking for
    # any row with source_length >= 1.  (length == 0 gives uniform weights
    # instead of the reference's NaN -- benign for valid inputs.)
    h_all = jnp.transpose(h_scr[...])                          # (Bt, T)
    lens = lens_ref[...]                                       # (Bt, 1) int32
    t_ids = jax.lax.broadcasted_iota(jnp.int32, (Bt, T), 1)
    masked = jnp.where(t_ids >= lens, jnp.float32(-1e30), h_all)
    m = jnp.max(masked, axis=1, keepdims=True)
    e = jnp.exp(masked - m)
    denom = jnp.sum(e, axis=1, keepdims=True)
    attn = e * pl.reciprocal(denom, approx=True)               # (Bt, T)

    # bmm(diag(attn_b), x_b) == per-timestep scaling; re-read x_ref here instead
    # of keeping the whole block live across the recurrence.
    out_ref[...] = (x_ref[...] * attn[:, :, None]).astype(out_ref.dtype)


def _vmem_limits():
    """Returns (vmem_limit_bytes for the compiler, byte budget for x/out blocks)."""
    cap = 64 * 1024 * 1024          # conservative default: v7x per-TensorCore VMEM
    try:
        cap = int(pltpu.get_tpu_info().vmem_capacity_bytes)
    except Exception:
        pass
    vmem_limit = (cap * 3) // 4     # 48 MiB on v7x, 96 MiB on v5e/v6e
    block_budget = (vmem_limit * 3) // 5   # headroom for gate slabs / temporaries
    return vmem_limit, block_budget


def _pick_b_tile(B, T, E, block_budget_bytes):
    # Per batch row: 2 (double-buffer) x 2 (in + out) x T*E*4 bytes.
    per_row = 16 * T * E
    rows = max(1, block_budget_bytes // per_row)
    rows = min(rows, 512)                       # diminishing returns past ~512
    if rows >= B:
        if B >= 256:
            # Keep >= 2 grid steps so both v7x TensorCores get work.
            half = -(-B // 2)
            return max(8, ((half + 7) // 8) * 8)
        return B
    return max(8, (rows // 8) * 8)              # mult. of 8 keeps BlockSpecs legal


def attention_forward(x, source_lengths, w_ih, w_hh, *, b_tile=None, time_chunk=8):
    """x: (B, T, E) f32 batch-first; source_lengths: (B,) int; returns (B, T, E)."""
    B, T, E = x.shape
    x = x.astype(jnp.float32)
    w_ih_t = jnp.transpose(w_ih).astype(jnp.float32)           # (E, 4)
    w_hh_c = jnp.reshape(w_hh, (4, 1)).astype(jnp.float32)     # (4, 1)
    lens2d = jnp.reshape(source_lengths.astype(jnp.int32), (B, 1))

    vmem_limit, block_budget = _vmem_limits()
    if b_tile is None:
        b_tile = _pick_b_tile(B, T, E, block_budget)
    else:
        b_tile = min(int(b_tile), B)
        if b_tile < B:
            b_tile = max(8, (b_tile // 8) * 8)
    time_chunk = max(1, min(int(time_chunk), T))

    grid = (pl.cdiv(B, b_tile),)
    kernel = functools.partial(attention_kernel, time_chunk=time_chunk)

    return pl.pallas_call(
        kernel,
        out_shape=jax.ShapeDtypeStruct((B, T, E), jnp.float32),
        grid=grid,
        in_specs=[
            pl.BlockSpec((b_tile, 1), lambda b: (b, 0)),          # lengths
            pl.BlockSpec((b_tile, T, E), lambda b: (b, 0, 0)),    # x
            pl.BlockSpec((E, 4), lambda b: (0, 0)),               # W_ih^T
            pl.BlockSpec((4, 1), lambda b: (0, 0)),               # W_hh
        ],
        out_specs=pl.BlockSpec((b_tile, T, E), lambda b: (b, 0, 0)),
        scratch_shapes=[pltpu.VMEM((T, b_tile), jnp.float32)],
        compiler_params=pltpu.CompilerParams(
            dimension_semantics=("parallel",),
            vmem_limit_bytes=vmem_limit),
    )(lens2d, x, w_ih_t, w_hh_c)


def attention_reference(x, source_lengths, w_ih, w_hh):
    """Pure-JAX reference mirroring the PyTorch forward pass."""
    B, T, E = x.shape

    def cell(carry, xt):                                          # xt: (B, E)
        h, c = carry
        z = xt @ w_ih.T + h @ w_hh.T                              # (B, 4)
        i = jax.nn.sigmoid(z[:, 0:1])
        f = jax.nn.sigmoid(z[:, 1:2])
        g = jnp.tanh(z[:, 2:3])
        o = jax.nn.sigmoid(z[:, 3:4])
        c = f * c + i * g
        h = o * jnp.tanh(c)
        return (h, c), h[:, 0]

    init = (jnp.zeros((B, 1), jnp.float32), jnp.zeros((B, 1), jnp.float32))
    _, hs = jax.lax.scan(cell, init, jnp.transpose(x, (1, 0, 2)))  # hs: (T, B)
    h_all = hs.T                                                   # (B, T)
    mask = jnp.arange(T)[None, :] >= source_lengths[:, None]
    masked = jnp.where(mask, -jnp.inf, h_all)
    attn = jax.nn.softmax(masked, axis=1)                          # (B, T)
    return x * attn[:, :, None]                                    # == bmm(diag(attn), x)


if __name__ == "__main__":
    # Small shapes consistent with the module: embed_size=E, hidden_size=1
    # (required by the squeeze/diag logic), batch=B, seq=T.
    B, T, E = 2, 8, 32
    key = jax.random.PRNGKey(0)
    kx, kih, khh = jax.random.split(key, 3)

    x = jax.random.normal(kx, (B, T, E), dtype=jnp.float32)
    # nn.LSTM default init: U(-1/sqrt(hidden), 1/sqrt(hidden)) = U(-1, 1) for hidden=1
    w_ih = jax.random.uniform(kih, (4, E), jnp.float32, minval=-1.0, maxval=1.0)
    w_hh = jax.random.uniform(khh, (4, 1), jnp.float32, minval=-1.0, maxval=1.0)
    source_lengths = jnp.array([5, 8], dtype=jnp.int32)

    out = jax.block_until_ready(attention_forward(x, source_lengths, w_ih, w_hh))

    ref = attention_reference(x, source_lengths, w_ih, w_hh)
    np.testing.assert_allclose(np.asarray(out), np.asarray(ref), rtol=3e-3, atol=3e-3)

    print("KERNEL_OK")
</pallas_src>

<mosaic_0001>
module attributes {stable_mosaic.version = 11 : i64} {
  func.func @attention_kernel(%arg0: i32, %arg1: memref<2x1xi32, #tpu.memory_space<vmem>>, %arg2: memref<2x8x32xf32, #tpu.memory_space<vmem>>, %arg3: memref<32x4xf32, #tpu.memory_space<vmem>>, %arg4: memref<4x1xf32, #tpu.memory_space<vmem>>, %arg5: memref<2x8x32xf32, #tpu.memory_space<vmem>>, %arg6: memref<8x2xf32, #tpu.memory_space<vmem>>) attributes {dimension_semantics = [#tpu.dimension_semantics<parallel>], iteration_bounds = array<i64: 1>, scalar_prefetch = 0 : i64, scratch_operands = 1 : i64, tpu.core_type = #tpu.core_type<tc>, window_params = [{transform_indices = @transform_0, window_bounds = array<i64: 2, 1>}, {transform_indices = @transform_1, window_bounds = array<i64: 2, 8, 32>}, {pipeline_mode = #tpu.pipeline_mode<synchronous>, transform_indices = @transform_2, window_bounds = array<i64: 32, 4>}, {pipeline_mode = #tpu.pipeline_mode<synchronous>, transform_indices = @transform_3, window_bounds = array<i64: 4, 1>}, {transform_indices = @transform_4, window_bounds = array<i64: 2, 8, 32>}]} {
    %c0 = arith.constant 0 : index
    %c0_0 = arith.constant 0 : index
    %0 = vector.load %arg3[%c0, %c0_0] : memref<32x4xf32, #tpu.memory_space<vmem>>, vector<32x4xf32>
    %c0_1 = arith.constant 0 : index
    %c0_2 = arith.constant 0 : index
    %1 = vector.load %arg4[%c0_1, %c0_2] : memref<4x1xf32, #tpu.memory_space<vmem>>, vector<4x1xf32>
    %2 = vector.shape_cast %1 : vector<4x1xf32> to vector<4x1xf32>
    %3 = vector.broadcast %2 : vector<4x1xf32> to vector<4x2xf32>
    %cst = arith.constant 0.000000e+00 : f32
    %4 = vector.broadcast %cst : f32 to vector<1x2xf32>
    %cst_3 = arith.constant 0.000000e+00 : f32
    %5 = vector.broadcast %cst_3 : f32 to vector<1x2xf32>
    %c0_4 = arith.constant 0 : index
    %c0_5 = arith.constant 0 : index
    %c0_6 = arith.constant 0 : index
    %6 = vector.load %arg2[%c0_4, %c0_5, %c0_6] : memref<2x8x32xf32, #tpu.memory_space<vmem>>, vector<2x8x32xf32>
    %7 = vector.shape_cast %6 : vector<2x8x32xf32> to vector<16x32xf32>
    %cst_7 = arith.constant dense<0.000000e+00> : vector<16x4xf32>
    %8 = tpu.matmul %7, %0, %cst_7 {dimension_numbers = #tpu.dot_dimension_numbers<[1], [0], [0], [1], [0, 0, 1, 1], [], []>} : vector<16x32xf32>, vector<32x4xf32>, vector<16x4xf32> -> vector<16x4xf32>
    %9 = vector.shape_cast %8 : vector<16x4xf32> to vector<2x8x4xf32>
    %10 = vector.extract_strided_slice %9 {offsets = [0, 0, 0], sizes = [2, 1, 4], strides = [1, 1, 1]} : vector<2x8x4xf32> to vector<2x1x4xf32>
    %11 = vector.shape_cast %10 : vector<2x1x4xf32> to vector<2x4xf32>
    %12 = tpu.transpose %11, [1, 0] : vector<2x4xf32> -> vector<4x2xf32>
    %13 = vector.broadcast %4 : vector<1x2xf32> to vector<4x2xf32>
    %14 = arith.mulf %13, %3 : vector<4x2xf32>
    %15 = arith.addf %12, %14 : vector<4x2xf32>
    %cst_8 = arith.constant 5.000000e-01 : f32
    %16 = vector.broadcast %cst_8 : f32 to vector<4x2xf32>
    %17 = arith.mulf %16, %15 : vector<4x2xf32>
    %18 = math.tanh %17 : vector<4x2xf32>
    %cst_9 = arith.constant 1.000000e+00 : f32
    %19 = vector.broadcast %cst_9 : f32 to vector<4x2xf32>
    %20 = arith.addf %18, %19 : vector<4x2xf32>
    %cst_10 = arith.constant 5.000000e-01 : f32
    %21 = vector.broadcast %cst_10 : f32 to vector<4x2xf32>
    %22 = arith.mulf %21, %20 : vector<4x2xf32>
    %23 = vector.extract_strided_slice %22 {offsets = [0, 0], sizes = [1, 2], strides = [1, 1]} : vector<4x2xf32> to vector<1x2xf32>
    %24 = vector.extract_strided_slice %22 {offsets = [1, 0], sizes = [1, 2], strides = [1, 1]} : vector<4x2xf32> to vector<1x2xf32>
    %25 = vector.extract_strided_slice %22 {offsets = [3, 0], sizes = [1, 2], strides = [1, 1]} : vector<4x2xf32> to vector<1x2xf32>
    %26 = vector.extract_strided_slice %15 {offsets = [2, 0], sizes = [1, 2], strides = [1, 1]} : vector<4x2xf32> to vector<1x2xf32>
    %27 = math.tanh %26 : vector<1x2xf32>
    %28 = arith.mulf %24, %5 : vector<1x2xf32>
    %29 = arith.mulf %23, %27 : vector<1x2xf32>
    %30 = arith.addf %28, %29 : vector<1x2xf32>
    %31 = math.tanh %30 : vector<1x2xf32>
    %32 = arith.mulf %25, %31 : vector<1x2xf32>
    %c0_11 = arith.constant 0 : index
    %c0_12 = arith.constant 0 : index
    %33 = vector.load %arg6[%c0_11, %c0_12] : memref<8x2xf32, #tpu.memory_space<vmem>>, vector<1x2xf32>
    tpu.vector_store %arg6[%c0_11, %c0_12], %32 {strides = array<i32>} : memref<8x2xf32, #tpu.memory_space<vmem>>, vector<1x2xf32>,
    %34 = vector.extract_strided_slice %9 {offsets = [0, 1, 0], sizes = [2, 1, 4], strides = [1, 1, 1]} : vector<2x8x4xf32> to vector<2x1x4xf32>
    %35 = vector.shape_cast %34 : vector<2x1x4xf32> to vector<2x4xf32>
    %36 = tpu.transpose %35, [1, 0] : vector<2x4xf32> -> vector<4x2xf32>
    %37 = vector.broadcast %32 : vector<1x2xf32> to vector<4x2xf32>
    %38 = arith.mulf %37, %3 : vector<4x2xf32>
    %39 = arith.addf %36, %38 : vector<4x2xf32>
    %cst_13 = arith.constant 5.000000e-01 : f32
    %40 = vector.broadcast %cst_13 : f32 to vector<4x2xf32>
    %41 = arith.mulf %40, %39 : vector<4x2xf32>
    %42 = math.tanh %41 : vector<4x2xf32>
    %cst_14 = arith.constant 1.000000e+00 : f32
    %43 = vector.broadcast %cst_14 : f32 to vector<4x2xf32>
    %44 = arith.addf %42, %43 : vector<4x2xf32>
    %cst_15 = arith.constant 5.000000e-01 : f32
    %45 = vector.broadcast %cst_15 : f32 to vector<4x2xf32>
    %46 = arith.mulf %45, %44 : vector<4x2xf32>
    %47 = vector.extract_strided_slice %46 {offsets = [0, 0], sizes = [1, 2], strides = [1, 1]} : vector<4x2xf32> to vector<1x2xf32>
    %48 = vector.extract_strided_slice %46 {offsets = [1, 0], sizes = [1, 2], strides = [1, 1]} : vector<4x2xf32> to vector<1x2xf32>
    %49 = vector.extract_strided_slice %46 {offsets = [3, 0], sizes = [1, 2], strides = [1, 1]} : vector<4x2xf32> to vector<1x2xf32>
    %50 = vector.extract_strided_slice %39 {offsets = [2, 0], sizes = [1, 2], strides = [1, 1]} : vector<4x2xf32> to vector<1x2xf32>
    %51 = math.tanh %50 : vector<1x2xf32>
    %52 = arith.mulf %48, %30 : vector<1x2xf32>
    %53 = arith.mulf %47, %51 : vector<1x2xf32>
    %54 = arith.addf %52, %53 : vector<1x2xf32>
    %55 = math.tanh %54 : vector<1x2xf32>
    %56 = arith.mulf %49, %55 : vector<1x2xf32>
    %c1 = arith.constant 1 : index
    %c0_16 = arith.constant 0 : index
    %57 = vector.load %arg6[%c1, %c0_16] : memref<8x2xf32, #tpu.memory_space<vmem>>, vector<1x2xf32>
    tpu.vector_store %arg6[%c1, %c0_16], %56 {strides = array<i32>} : memref<8x2xf32, #tpu.memory_space<vmem>>, vector<1x2xf32>,
    %58 = vector.extract_strided_slice %9 {offsets = [0, 2, 0], sizes = [2, 1, 4], strides = [1, 1, 1]} : vector<2x8x4xf32> to vector<2x1x4xf32>
    %59 = vector.shape_cast %58 : vector<2x1x4xf32> to vector<2x4xf32>
    %60 = tpu.transpose %59, [1, 0] : vector<2x4xf32> -> vector<4x2xf32>
    %61 = vector.broadcast %56 : vector<1x2xf32> to vector<4x2xf32>
    %62 = arith.mulf %61, %3 : vector<4x2xf32>
    %63 = arith.addf %60, %62 : vector<4x2xf32>
    %cst_17 = arith.constant 5.000000e-01 : f32
    %64 = vector.broadcast %cst_17 : f32 to vector<4x2xf32>
    %65 = arith.mulf %64, %63 : vector<4x2xf32>
    %66 = math.tanh %65 : vector<4x2xf32>
    %cst_18 = arith.constant 1.000000e+00 : f32
    %67 = vector.broadcast %cst_18 : f32 to vector<4x2xf32>
    %68 = arith.addf %66, %67 : vector<4x2xf32>
    %cst_19 = arith.constant 5.000000e-01 : f32
    %69 = vector.broadcast %cst_19 : f32 to vector<4x2xf32>
    %70 = arith.mulf %69, %68 : vector<4x2xf32>
    %71 = vector.extract_strided_slice %70 {offsets = [0, 0], sizes = [1, 2], strides = [1, 1]} : vector<4x2xf32> to vector<1x2xf32>
    %72 = vector.extract_strided_slice %70 {offsets = [1, 0], sizes = [1, 2], strides = [1, 1]} : vector<4x2xf32> to vector<1x2xf32>
    %73 = vector.extract_strided_slice %70 {offsets = [3, 0], sizes = [1, 2], strides = [1, 1]} : vector<4x2xf32> to vector<1x2xf32>
    %74 = vector.extract_strided_slice %63 {offsets = [2, 0], sizes = [1, 2], strides = [1, 1]} : vector<4x2xf32> to vector<1x2xf32>
    %75 = math.tanh %74 : vector<1x2xf32>
    %76 = arith.mulf %72, %54 : vector<1x2xf32>
    %77 = arith.mulf %71, %75 : vector<1x2xf32>
    %78 = arith.addf %76, %77 : vector<1x2xf32>
    %79 = math.tanh %78 : vector<1x2xf32>
    %80 = arith.mulf %73, %79 : vector<1x2xf32>
    %c2 = arith.constant 2 : index
    %c0_20 = arith.constant 0 : index
    %81 = vector.load %arg6[%c2, %c0_20] : memref<8x2xf32, #tpu.memory_space<vmem>>, vector<1x2xf32>
    tpu.vector_store %arg6[%c2, %c0_20], %80 {strides = array<i32>} : memref<8x2xf32, #tpu.memory_space<vmem>>, vector<1x2xf32>,
    %82 = vector.extract_strided_slice %9 {offsets = [0, 3, 0], sizes = [2, 1, 4], strides = [1, 1, 1]} : vector<2x8x4xf32> to vector<2x1x4xf32>
    %83 = vector.shape_cast %82 : vector<2x1x4xf32> to vector<2x4xf32>
    %84 = tpu.transpose %83, [1, 0] : vector<2x4xf32> -> vector<4x2xf32>
    %85 = vector.broadcast %80 : vector<1x2xf32> to vector<4x2xf32>
    %86 = arith.mulf %85, %3 : vector<4x2xf32>
    %87 = arith.addf %84, %86 : vector<4x2xf32>
    %cst_21 = arith.constant 5.000000e-01 : f32
    %88 = vector.broadcast %cst_21 : f32 to vector<4x2xf32>
    %89 = arith.mulf %88, %87 : vector<4x2xf32>
    %90 = math.tanh %89 : vector<4x2xf32>
    %cst_22 = arith.constant 1.000000e+00 : f32
    %91 = vector.broadcast %cst_22 : f32 to vector<4x2xf32>
    %92 = arith.addf %90, %91 : vector<4x2xf32>
    %cst_23 = arith.constant 5.000000e-01 : f32
    %93 = vector.broadcast %cst_23 : f32 to vector<4x2xf32>
    %94 = arith.mulf %93, %92 : vector<4x2xf32>
    %95 = vector.extract_strided_slice %94 {offsets = [0, 0], sizes = [1, 2], strides = [1, 1]} : vector<4x2xf32> to vector<1x2xf32>
    %96 = vector.extract_strided_slice %94 {offsets = [1, 0], sizes = [1, 2], strides = [1, 1]} : vector<4x2xf32> to vector<1x2xf32>
    %97 = vector.extract_strided_slice %94 {offsets = [3, 0], sizes = [1, 2], strides = [1, 1]} : vector<4x2xf32> to vector<1x2xf32>
    %98 = vector.extract_strided_slice %87 {offsets = [2, 0], sizes = [1, 2], strides = [1, 1]} : vector<4x2xf32> to vector<1x2xf32>
    %99 = math.tanh %98 : vector<1x2xf32>
    %100 = arith.mulf %96, %78 : vector<1x2xf32>
    %101 = arith.mulf %95, %99 : vector<1x2xf32>
    %102 = arith.addf %100, %101 : vector<1x2xf32>
    %103 = math.tanh %102 : vector<1x2xf32>
    %104 = arith.mulf %97, %103 : vector<1x2xf32>
    %c3 = arith.constant 3 : index
    %c0_24 = arith.constant 0 : index
    %105 = vector.load %arg6[%c3, %c0_24] : memref<8x2xf32, #tpu.memory_space<vmem>>, vector<1x2xf32>
    tpu.vector_store %arg6[%c3, %c0_24], %104 {strides = array<i32>} : memref<8x2xf32, #tpu.memory_space<vmem>>, vector<1x2xf32>,
    %106 = vector.extract_strided_slice %9 {offsets = [0, 4, 0], sizes = [2, 1, 4], strides = [1, 1, 1]} : vector<2x8x4xf32> to vector<2x1x4xf32>
    %107 = vector.shape_cast %106 : vector<2x1x4xf32> to vector<2x4xf32>
    %108 = tpu.transpose %107, [1, 0] : vector<2x4xf32> -> vector<4x2xf32>
    %109 = vector.broadcast %104 : vector<1x2xf32> to vector<4x2xf32>
    %110 = arith.mulf %109, %3 : vector<4x2xf32>
    %111 = arith.addf %108, %110 : vector<4x2xf32>
    %cst_25 = arith.constant 5.000000e-01 : f32
    %112 = vector.broadcast %cst_25 : f32 to vector<4x2xf32>
    %113 = arith.mulf %112, %111 : vector<4x2xf32>
    %114 = math.tanh %113 : vector<4x2xf32>
    %cst_26 = arith.constant 1.000000e+00 : f32
    %115 = vector.broadcast %cst_26 : f32 to vector<4x2xf32>
    %116 = arith.addf %114, %115 : vector<4x2xf32>
    %cst_27 = arith.constant 5.000000e-01 : f32
    %117 = vector.broadcast %cst_27 : f32 to vector<4x2xf32>
    %118 = arith.mulf %117, %116 : vector<4x2xf32>
    %119 = vector.extract_strided_slice %118 {offsets = [0, 0], sizes = [1, 2], strides = [1, 1]} : vector<4x2xf32> to vector<1x2xf32>
    %120 = vector.extract_strided_slice %118 {offsets = [1, 0], sizes = [1, 2], strides = [1, 1]} : vector<4x2xf32> to vector<1x2xf32>
    %121 = vector.extract_strided_slice %118 {offsets = [3, 0], sizes = [1, 2], strides = [1, 1]} : vector<4x2xf32> to vector<1x2xf32>
    %122 = vector.extract_strided_slice %111 {offsets = [2, 0], sizes = [1, 2], strides = [1, 1]} : vector<4x2xf32> to vector<1x2xf32>
    %123 = math.tanh %122 : vector<1x2xf32>
    %124 = arith.mulf %120, %102 : vector<1x2xf32>
    %125 = arith.mulf %119, %123 : vector<1x2xf32>
    %126 = arith.addf %124, %125 : vector<1x2xf32>
    %127 = math.tanh %126 : vector<1x2xf32>
    %128 = arith.mulf %121, %127 : vector<1x2xf32>
    %c4 = arith.constant 4 : index
    %c0_28 = arith.constant 0 : index
    %129 = vector.load %arg6[%c4, %c0_28] : memref<8x2xf32, #tpu.memory_space<vmem>>, vector<1x2xf32>
    tpu.vector_store %arg6[%c4, %c0_28], %128 {strides = array<i32>} : memref<8x2xf32, #tpu.memory_space<vmem>>, vector<1x2xf32>,
    %130 = vector.extract_strided_slice %9 {offsets = [0, 5, 0], sizes = [2, 1, 4], strides = [1, 1, 1]} : vector<2x8x4xf32> to vector<2x1x4xf32>
    %131 = vector.shape_cast %130 : vector<2x1x4xf32> to vector<2x4xf32>
    %132 = tpu.transpose %131, [1, 0] : vector<2x4xf32> -> vector<4x2xf32>
    %133 = vector.broadcast %128 : vector<1x2xf32> to vector<4x2xf32>
    %134 = arith.mulf %133, %3 : vector<4x2xf32>
    %135 = arith.addf %132, %134 : vector<4x2xf32>
    %cst_29 = arith.constant 5.000000e-01 : f32
    %136 = vector.broadcast %cst_29 : f32 to vector<4x2xf32>
    %137 = arith.mulf %136, %135 : vector<4x2xf32>
    %138 = math.tanh %137 : vector<4x2xf32>
    %cst_30 = arith.constant 1.000000e+00 : f32
    %139 = vector.broadcast %cst_30 : f32 to vector<4x2xf32>
    %140 = arith.addf %138, %139 : vector<4x2xf32>
    %cst_31 = arith.constant 5.000000e-01 : f32
    %141 = vector.broadcast %cst_31 : f32 to vector<4x2xf32>
    %142 = arith.mulf %141, %140 : vector<4x2xf32>
    %143 = vector.extract_strided_slice %142 {offsets = [0, 0], sizes = [1, 2], strides = [1, 1]} : vector<4x2xf32> to vector<1x2xf32>
    %144 = vector.extract_strided_slice %142 {offsets = [1, 0], sizes = [1, 2], strides = [1, 1]} : vector<4x2xf32> to vector<1x2xf32>
    %145 = vector.extract_strided_slice %142 {offsets = [3, 0], sizes = [1, 2], strides = [1, 1]} : vector<4x2xf32> to vector<1x2xf32>
    %146 = vector.extract_strided_slice %135 {offsets = [2, 0], sizes = [1, 2], strides = [1, 1]} : vector<4x2xf32> to vector<1x2xf32>
    %147 = math.tanh %146 : vector<1x2xf32>
    %148 = arith.mulf %144, %126 : vector<1x2xf32>
    %149 = arith.mulf %143, %147 : vector<1x2xf32>
    %150 = arith.addf %148, %149 : vector<1x2xf32>
    %151 = math.tanh %150 : vector<1x2xf32>
    %152 = arith.mulf %145, %151 : vector<1x2xf32>
    %c5 = arith.constant 5 : index
    %c0_32 = arith.constant 0 : index
    %153 = vector.load %arg6[%c5, %c0_32] : memref<8x2xf32, #tpu.memory_space<vmem>>, vector<1x2xf32>
    tpu.vector_store %arg6[%c5, %c0_32], %152 {strides = array<i32>} : memref<8x2xf32, #tpu.memory_space<vmem>>, vector<1x2xf32>,
    %154 = vector.extract_strided_slice %9 {offsets = [0, 6, 0], sizes = [2, 1, 4], strides = [1, 1, 1]} : vector<2x8x4xf32> to vector<2x1x4xf32>
    %155 = vector.shape_cast %154 : vector<2x1x4xf32> to vector<2x4xf32>
    %156 = tpu.transpose %155, [1, 0] : vector<2x4xf32> -> vector<4x2xf32>
    %157 = vector.broadcast %152 : vector<1x2xf32> to vector<4x2xf32>
    %158 = arith.mulf %157, %3 : vector<4x2xf32>
    %159 = arith.addf %156, %158 : vector<4x2xf32>
    %cst_33 = arith.constant 5.000000e-01 : f32
    %160 = vector.broadcast %cst_33 : f32 to vector<4x2xf32>
    %161 = arith.mulf %160, %159 : vector<4x2xf32>
    %162 = math.tanh %161 : vector<4x2xf32>
    %cst_34 = arith.constant 1.000000e+00 : f32
    %163 = vector.broadcast %cst_34 : f32 to vector<4x2xf32>
    %164 = arith.addf %162, %163 : vector<4x2xf32>
    %cst_35 = arith.constant 5.000000e-01 : f32
    %165 = vector.broadcast %cst_35 : f32 to vector<4x2xf32>
    %166 = arith.mulf %165, %164 : vector<4x2xf32>
    %167 = vector.extract_strided_slice %166 {offsets = [0, 0], sizes = [1, 2], strides = [1, 1]} : vector<4x2xf32> to vector<1x2xf32>
    %168 = vector.extract_strided_slice %166 {offsets = [1, 0], sizes = [1, 2], strides = [1, 1]} : vector<4x2xf32> to vector<1x2xf32>
    %169 = vector.extract_strided_slice %166 {offsets = [3, 0], sizes = [1, 2], strides = [1, 1]} : vector<4x2xf32> to vector<1x2xf32>
    %170 = vector.extract_strided_slice %159 {offsets = [2, 0], sizes = [1, 2], strides = [1, 1]} : vector<4x2xf32> to vector<1x2xf32>
    %171 = math.tanh %170 : vector<1x2xf32>
    %172 = arith.mulf %168, %150 : vector<1x2xf32>
    %173 = arith.mulf %167, %171 : vector<1x2xf32>
    %174 = arith.addf %172, %173 : vector<1x2xf32>
    %175 = math.tanh %174 : vector<1x2xf32>
    %176 = arith.mulf %169, %175 : vector<1x2xf32>
    %c6 = arith.constant 6 : index
    %c0_36 = arith.constant 0 : index
    %177 = vector.load %arg6[%c6, %c0_36] : memref<8x2xf32, #tpu.memory_space<vmem>>, vector<1x2xf32>
    tpu.vector_store %arg6[%c6, %c0_36], %176 {strides = array<i32>} : memref<8x2xf32, #tpu.memory_space<vmem>>, vector<1x2xf32>,
    %178 = vector.extract_strided_slice %9 {offsets = [0, 7, 0], sizes = [2, 1, 4], strides = [1, 1, 1]} : vector<2x8x4xf32> to vector<2x1x4xf32>
    %179 = vector.shape_cast %178 : vector<2x1x4xf32> to vector<2x4xf32>
    %180 = tpu.transpose %179, [1, 0] : vector<2x4xf32> -> vector<4x2xf32>
    %181 = vector.broadcast %176 : vector<1x2xf32> to vector<4x2xf32>
    %182 = arith.mulf %181, %3 : vector<4x2xf32>
    %183 = arith.addf %180, %182 : vector<4x2xf32>
    %cst_37 = arith.constant 5.000000e-01 : f32
    %184 = vector.broadcast %cst_37 : f32 to vector<4x2xf32>
    %185 = arith.mulf %184, %183 : vector<4x2xf32>
    %186 = math.tanh %185 : vector<4x2xf32>
    %cst_38 = arith.constant 1.000000e+00 : f32
    %187 = vector.broadcast %cst_38 : f32 to vector<4x2xf32>
    %188 = arith.addf %186, %187 : vector<4x2xf32>
    %cst_39 = arith.constant 5.000000e-01 : f32
    %189 = vector.broadcast %cst_39 : f32 to vector<4x2xf32>
    %190 = arith.mulf %189, %188 : vector<4x2xf32>
    %191 = vector.extract_strided_slice %190 {offsets = [0, 0], sizes = [1, 2], strides = [1, 1]} : vector<4x2xf32> to vector<1x2xf32>
    %192 = vector.extract_strided_slice %190 {offsets = [1, 0], sizes = [1, 2], strides = [1, 1]} : vector<4x2xf32> to vector<1x2xf32>
    %193 = vector.extract_strided_slice %190 {offsets = [3, 0], sizes = [1, 2], strides = [1, 1]} : vector<4x2xf32> to vector<1x2xf32>
    %194 = vector.extract_strided_slice %183 {offsets = [2, 0], sizes = [1, 2], strides = [1, 1]} : vector<4x2xf32> to vector<1x2xf32>
    %195 = math.tanh %194 : vector<1x2xf32>
    %196 = arith.mulf %192, %174 : vector<1x2xf32>
    %197 = arith.mulf %191, %195 : vector<1x2xf32>
    %198 = arith.addf %196, %197 : vector<1x2xf32>
    %199 = math.tanh %198 : vector<1x2xf32>
    %200 = arith.mulf %193, %199 : vector<1x2xf32>
    %c7 = arith.constant 7 : index
    %c0_40 = arith.constant 0 : index
    %201 = vector.load %arg6[%c7, %c0_40] : memref<8x2xf32, #tpu.memory_space<vmem>>, vector<1x2xf32>
    tpu.vector_store %arg6[%c7, %c0_40], %200 {strides = array<i32>} : memref<8x2xf32, #tpu.memory_space<vmem>>, vector<1x2xf32>,
    %c0_41 = arith.constant 0 : index
    %c0_42 = arith.constant 0 : index
    %202 = vector.load %arg6[%c0_41, %c0_42] : memref<8x2xf32, #tpu.memory_space<vmem>>, vector<8x2xf32>
    %203 = tpu.transpose %202, [1, 0] : vector<8x2xf32> -> vector<2x8xf32>
    %c0_43 = arith.constant 0 : index
    %c0_44 = arith.constant 0 : index
    %204 = vector.load %arg1[%c0_43, %c0_44] : memref<2x1xi32, #tpu.memory_space<vmem>>, vector<2x1xi32>
    %205 = tpu.iota {dimensions = array<i32: 1>} : vector<2x8xi32>
    %206 = vector.broadcast %204 : vector<2x1xi32> to vector<2x8xi32>
    %207 = arith.cmpi sge, %205, %206 : vector<2x8xi32>
    %cst_45 = arith.constant -1.000000e+30 : f32
    %208 = vector.broadcast %cst_45 : f32 to vector<2x8xf32>
    %209 = arith.select %207, %208, %203 : vector<2x8xi1>, vector<2x8xf32>
    %cst_46 = arith.constant dense<0xFF800000> : vector<2xf32>
    %210 = vector.multi_reduction <maximumf>, %209, %cst_46 [1] : vector<2x8xf32> to vector<2xf32>
    %211 = vector.shape_cast %210 : vector<2xf32> to vector<2x1xf32>
    %212 = vector.broadcast %211 : vector<2x1xf32> to vector<2x8xf32>
    %213 = arith.subf %209, %212 : vector<2x8xf32>
    %214 = math.exp %213 : vector<2x8xf32>
    %cst_47 = arith.constant dense<0.000000e+00> : vector<2xf32>
    %215 = vector.multi_reduction <add>, %214, %cst_47 [1] : vector<2x8xf32> to vector<2xf32>
    %216 = vector.shape_cast %215 : vector<2xf32> to vector<2x1xf32>
    %217 = tpu.reciprocal %216 {approx = true} : vector<2x1xf32> -> vector<2x1xf32>
    %218 = vector.broadcast %217 : vector<2x1xf32> to vector<2x8xf32>
    %219 = arith.mulf %214, %218 : vector<2x8xf32>
    %c0_48 = arith.constant 0 : index
    %c0_49 = arith.constant 0 : index
    %c0_50 = arith.constant 0 : index
    %220 = vector.load %arg2[%c0_48, %c0_49, %c0_50] : memref<2x8x32xf32, #tpu.memory_space<vmem>>, vector<2x8x32xf32>
    %221 = vector.shape_cast %219 : vector<2x8xf32> to vector<2x8x1xf32>
    %222 = vector.broadcast %221 : vector<2x8x1xf32> to vector<2x8x32xf32>
    %223 = arith.mulf %220, %222 : vector<2x8x32xf32>
    %c0_51 = arith.constant 0 : index
    %c0_52 = arith.constant 0 : index
    %c0_53 = arith.constant 0 : index
    %224 = vector.load %arg5[%c0_51, %c0_52, %c0_53] : memref<2x8x32xf32, #tpu.memory_space<vmem>>, vector<2x8x32xf32>
    tpu.vector_store %arg5[%c0_51, %c0_52, %c0_53], %223 {strides = array<i32>} : memref<2x8x32xf32, #tpu.memory_space<vmem>>, vector<2x8x32xf32>,
    return
  }
  func.func @transform_0(%arg0: i32) -> (i32, i32) {
    %c0_i32 = arith.constant 0 : i32
    %c0_i32_0 = arith.constant 0 : i32
    return %arg0, %c0_i32 : i32, i32
  }
  func.func @transform_1(%arg0: i32) -> (i32, i32, i32) {
    %c0_i32 = arith.constant 0 : i32
    %c0_i32_0 = arith.constant 0 : i32
    %c0_i32_1 = arith.constant 0 : i32
    return %arg0, %c0_i32, %c0_i32_0 : i32, i32, i32
  }
  func.func @transform_2(%arg0: i32) -> (i32, i32) {
    %c0_i32 = arith.constant 0 : i32
    %c0_i32_0 = arith.constant 0 : i32
    %c0_i32_1 = arith.constant 0 : i32
    return %c0_i32, %c0_i32_0 : i32, i32
  }
  func.func @transform_3(%arg0: i32) -> (i32, i32) {
    %c0_i32 = arith.constant 0 : i32
    %c0_i32_0 = arith.constant 0 : i32
    %c0_i32_1 = arith.constant 0 : i32
    return %c0_i32, %c0_i32_0 : i32, i32
  }
  func.func @transform_4(%arg0: i32) -> (i32, i32, i32) {
    %c0_i32 = arith.constant 0 : i32
    %c0_i32_0 = arith.constant 0 : i32
    %c0_i32_1 = arith.constant 0 : i32
    return %arg0, %c0_i32, %c0_i32_0 : i32, i32, i32
  }
}

</mosaic_0001>

<llo_original>
// kernel: tpu_custom_call.1
$region0: #{tpu_custom_call.1}
  #allocation0 [shape = 'u32[]', space=smem, size = 0x4, offset = 0x4, fixed_abs, tag = 'smem constant byte address 0x4 - core index']
  #allocation1 [shape = 'u32[144,128]{1,0:T(1,128)}', space=vmem, size = 0x12000, scoped, tag = 'internal scratch']
  #allocation2 [shape = 'f32[8,2]{1,0:T(8,128)}', space=vmem, size = 0x1000, scoped, tag = 'scratch operand']
  %s0 = inlined_call_operand.vmem [shape: s32[2,1], index: 0, kind: input, shape index: {}]
  %s1 = inlined_call_operand.vmem [shape: f32[2,8,32], index: 1, kind: input, shape index: {}]
  %s2 = inlined_call_operand.vmem [shape: f32[32,4], index: 2, kind: input, shape index: {}]
  %s3 = inlined_call_operand.vmem [shape: f32[4,1], index: 3, kind: input, shape index: {}]
  %s4 = inlined_call_operand.hbm [shape: f32[2,8,32], index: 4, kind: output, shape index: {}]
  %s5 = sld [smem:[#allocation0]]
  $region26: #{tpu_custom_call.1} parent=0
    _
  %s7 = ssub.s32 1, %s5
  %s8 = scalar_select 0, %s7, %s5
  $region1: #{tpu_custom_call.1} parent=0
    #allocation3 [shape = 'u8[8192]{0}', space=vmem, size = 0x2000, scoped, tag = 'output window, operand 0, single buffered']
    #allocation4 [shape = 's32[1]{0}', space=sflag, size = 0x4, scoped, tag = 'scoped memory for tpu_custom_call.1']
    %9 = vsyncpa [#allocation4], 0
    // Predicated region
    $region2: #{tpu_custom_call.1} parent=1 // pred_check
      _
    $region3: #{tpu_custom_call.1} parent=1 // pred_check_branch
      %11 = sbr.rel (0) target = $region5
    $region4: #{tpu_custom_call.1} parent=1 // pred_region
      _
    $region5: #{tpu_custom_call.1} parent=1 // pred_fallthru
      _
    // Predicated region
    $region6: #{tpu_custom_call.1} parent=1 // pred_check
      _
    $region7: #{tpu_custom_call.1} parent=1 // pred_check_branch
      %13 = sbr.rel (0) target = $region9
    $region8: #{tpu_custom_call.1} parent=1 // pred_region
      _
    $region9: #{tpu_custom_call.1} parent=1 // pred_fallthru
      _
    // Predicated region
    $region10: #{tpu_custom_call.1} parent=1 // pred_check
      _
    $region11: #{tpu_custom_call.1} parent=1 // pred_check_branch
      %15 = sbr.rel (0) target = $region13
    $region12: #{tpu_custom_call.1} parent=1 // pred_region
      _
    $region13: #{tpu_custom_call.1} parent=1 // pred_fallthru
      _
    // Predicated region
    $region14: #{tpu_custom_call.1} parent=1 // pred_check
      _
    $region15: #{tpu_custom_call.1} parent=1 // pred_check_branch
      %17 = sbr.rel (0) target = $region17
    $region16: #{tpu_custom_call.1} parent=1 // pred_region
      _
    $region17: #{tpu_custom_call.1} parent=1 // pred_fallthru
      _
    %v18 = vld [vmem:[%s2] sm:$0xff]
    %v19 = vld [vmem:[%s2 + $0x8] sm:$0xff]
    %v20 = vld [vmem:[%s2 + $0x10] sm:$0xff]
    %v21 = vld [vmem:[%s2 + $0x18] sm:$0xff]
    %v22 = vld [vmem:[%s3] sm:$0xf]
    %24 = vset.pattern.permute.xlu0 0
    %25 = vperm.xlu0 %24, %v22
    %v26 = vpop.permute.xlu0 %25
    %v28 = vld [vmem:[%s1] sm:$0xff]
    %v29 = vld [vmem:[%s1 + $0x8] sm:$0xff]
    %vm30 = vcmask 261120
    %v32 = vsel %vm30, %v28, 0
    %v35 = vsel %vm30, %v29, 0
    %37 = vmatprep.subr.mxu0 0.0
    %38 = vmatpush1.msra.mxu0 %v18
    %39 = vmatprep.subr.mxu0 0.0
    %40 = vmatpush1.msra.mxu0 %v19
    %41 = vmatprep.subr.mxu0 0.0
    %42 = vmatpush1.msra.mxu0 %v20
    %43 = vmatprep.subr.mxu0 0.0
    %44 = vmatpush1.msra.mxu0 %v21
    %45 = vmatprep.subr.mxu0 0.0
    %46 = vmatpush1.msra.mxu0 0.0
    %47 = vmatprep.subr.mxu0 0.0
    %48 = vmatpush1.msra.mxu0 0.0
    %49 = vmatprep.subr.mxu0 0.0
    %50 = vmatpush1.msra.mxu0 0.0
    %51 = vmatprep.subr.mxu0 0.0
    %52 = vmatpush1.msra.mxu0 0.0
    %53 = vmatprep.subr.mxu0 0.0
    %54 = vmatpush1.msra.mxu0 0.0
    %55 = vmatprep.subr.mxu0 0.0
    %56 = vmatpush1.msra.mxu0 0.0
    %57 = vmatprep.subr.mxu0 0.0
    %58 = vmatpush1.msra.mxu0 0.0
    %59 = vmatprep.subr.mxu0 0.0
    %60 = vmatpush1.msra.mxu0 0.0
    %61 = vmatprep.subr.mxu0 0.0
    %62 = vmatpush1.msra.mxu0 0.0
    %63 = vmatprep.subr.mxu0 0.0
    %64 = vmatpush1.msra.mxu0 0.0
    %65 = vmatprep.subr.mxu0 0.0
    %66 = vmatpush1.msra.mxu0 0.0
    %67 = vmatprep.subr.mxu0 0.0
    %68 = vmatpush1.msra.mxu0 0.0
    %69 = vmatprep.subr.mxu0 0.0
    %70 = vmatpush1.msra.mxu0 0.0
    %71 = vmatprep.subr.mxu0 0.0
    %72 = vmatpush1.msra.mxu0 0.0
    %73 = vmatprep.subr.mxu0 0.0
    %74 = vmatpush1.msra.mxu0 0.0
    %75 = vmatprep.subr.mxu0 0.0
    %76 = vmatpush1.msra.mxu0 0.0
    %77 = vmatprep.subr.mxu0 0.0
    %78 = vmatpush1.msra.mxu0 0.0
    %79 = vmatprep.subr.mxu0 0.0
    %80 = vmatpush1.msra.mxu0 0.0
    %81 = vmatprep.subr.mxu0 0.0
    %82 = vmatpush1.msra.mxu0 0.0
    %83 = vmatprep.subr.mxu0 0.0
    %84 = vmatpush1.msra.mxu0 0.0
    %85 = vmatprep.subr.mxu0 0.0
    %86 = vmatpush1.msra.mxu0 0.0
    %87 = vmatprep.subr.mxu0 0.0
    %88 = vmatpush1.msra.mxu0 0.0
    %89 = vmatprep.subr.mxu0 0.0
    %90 = vmatpush1.msra.mxu0 0.0
    %91 = vmatprep.subr.mxu0 0.0
    %92 = vmatpush1.msra.mxu0 0.0
    %93 = vmatprep.subr.mxu0 0.0
    %94 = vmatpush1.msra.mxu0 0.0
    %95 = vmatprep.subr.mxu0 0.0
    %96 = vmatpush1.msra.mxu0 0.0
    %97 = vmatprep.subr.mxu0 0.0
    %98 = vmatpush1.msra.mxu0 0.0
    %99 = vmatprep.subr.mxu0 0.0
    %100 = vmatpush1.msra.mxu0 0.0
    %101 = vmatprep.mubr.f32.mxu0 0.0
    %102 = vmatmul.mubr.f32.gmra.mrb[0].mxu0 %v32
    %v103 = vpop.f32.mrb[0].mxu0
    %v104 = vadd.f32 0.0, %v103
    %v105 = vpop.f32.mrb[0].mxu0
    %106 = vmatprep.mubr.f32.mxu0 0.0
    %107 = vmatmul.mubr.f32.gmra.mrb[0].mxu0 %v35
    %v108 = vpop.f32.mrb[0].mxu0
    %v109 = vadd.f32 0.0, %v108
    %v110 = vpop.f32.mrb[0].mxu0
    %111 = vdwg.mxu0
    %v114 = vrot.slane %v109, 7
    %vm115 = vcmask 1041409
    %v116 = vsel %vm115, %v114, %v104
    %118 = vxpose.xlu0.b32.start [1/16] %v116, 128
    %119 = vxpose.xlu0.b32.cont [2/16] 0.0, 128
    %120 = vxpose.xlu0.b32.cont [3/16] 0.0, 128
    %121 = vxpose.xlu0.b32.cont [4/16] 0.0, 128
    %122 = vxpose.xlu0.b32.cont [5/16] 0.0, 128
    %123 = vxpose.xlu0.b32.cont [6/16] 0.0, 128
    %124 = vxpose.xlu0.b32.cont [7/16] 0.0, 128
    %125 = vxpose.xlu0.b32.cont [8/16] 0.0, 128
    %126 = vxpose.xlu0.b32.cont [9/16] 0.0, 128
    %127 = vxpose.xlu0.b32.cont [10/16] 0.0, 128
    %128 = vxpose.xlu0.b32.cont [11/16] 0.0, 128
    %129 = vxpose.xlu0.b32.cont [12/16] 0.0, 128
    %130 = vxpose.xlu0.b32.cont [13/16] 0.0, 128
    %131 = vxpose.xlu0.b32.cont [14/16] 0.0, 128
    %132 = vxpose.xlu0.b32.cont [15/16] 0.0, 128
    %133 = vxpose.xlu0.b32.end [16/16] 0.0, 128
    %v134 = vpop.trf.xlu0
    %v135 = vpop.trf.xlu0
    %v136 = vpop.trf.xlu0
    %v137 = vpop.trf.xlu0
    %v138 = vpop.trf.xlu0
    %v139 = vpop.trf.xlu0
    %v140 = vpop.trf.xlu0
    %v141 = vpop.trf.xlu0
    %v142 = vpop.trf.xlu0
    %v143 = vpop.trf.xlu0
    %v144 = vpop.trf.xlu0
    %v145 = vpop.trf.xlu0
    %v146 = vpop.trf.xlu0
    %v147 = vpop.trf.xlu0
    %v148 = vpop.trf.xlu0
    %v149 = vpop.trf.xlu0
    %v150 = vmul.f32 %v26, 0.0
    %v151 = vadd.f32 %v134, %v150
    %v152 = vmul.f32 %v151, 0.5
    %v153 = vtanh.pop %v152
    %v154 = vadd.f32 %v153, 1.0
    %v155 = vmul.f32 %v154, 0.5
    %v156 = vtanh.pop %v151
    %v157 = vmul.f32 %v155, 0.0
    %v159 = vrot.slane %v156, 2
    %v161 = vmul.f32 %v155, %v159
    %v163 = vrot.slane %v161, 7
    %v165 = vadd.f32 %v157, %v163
    %v166 = vtanh.pop %v165
    %v168 = vrot.slane %v166, 6
    %v170 = vmul.f32 %v155, %v168
    %vm171 = vcmask 11267
    %172 = vst.msk [vmem:[#allocation2 - $0x3] sm:$0x8] %vm171, %v170
    %v173 = vrot.slane %v104, 1
    %v174 = vsel %vm115, %v109, %v173
    %176 = vxpose.xlu0.b32.start [1/16] %v174, 128
    %177 = vxpose.xlu0.b32.cont [2/16] 0.0, 128
    %178 = vxpose.xlu0.b32.cont [3/16] 0.0, 128
    %179 = vxpose.xlu0.b32.cont [4/16] 0.0, 128
    %180 = vxpose.xlu0.b32.cont [5/16] 0.0, 128
    %181 = vxpose.xlu0.b32.cont [6/16] 0.0, 128
    %182 = vxpose.xlu0.b32.cont [7/16] 0.0, 128
    %183 = vxpose.xlu0.b32.cont [8/16] 0.0, 128
    %184 = vxpose.xlu0.b32.cont [9/16] 0.0, 128
    %185 = vxpose.xlu0.b32.cont [10/16] 0.0, 128
    %186 = vxpose.xlu0.b32.cont [11/16] 0.0, 128
    %187 = vxpose.xlu0.b32.cont [12/16] 0.0, 128
    %188 = vxpose.xlu0.b32.cont [13/16] 0.0, 128
    %189 = vxpose.xlu0.b32.cont [14/16] 0.0, 128
    %190 = vxpose.xlu0.b32.cont [15/16] 0.0, 128
    %191 = vxpose.xlu0.b32.end [16/16] 0.0, 128
    %v192 = vpop.trf.xlu0
    %v193 = vpop.trf.xlu0
    %v194 = vpop.trf.xlu0
    %v195 = vpop.trf.xlu0
    %v196 = vpop.trf.xlu0
    %v197 = vpop.trf.xlu0
    %v198 = vpop.trf.xlu0
    %v199 = vpop.trf.xlu0
    %v200 = vpop.trf.xlu0
    %v201 = vpop.trf.xlu0
    %v202 = vpop.trf.xlu0
    %v203 = vpop.trf.xlu0
    %v204 = vpop.trf.xlu0
    %v205 = vpop.trf.xlu0
    %v206 = vpop.trf.xlu0
    %v207 = vpop.trf.xlu0
    %v208 = vlaneseq
    %v209 = vshrl.u32 %v208, 7
    %v210 = vsub.s32 3, %v209
    %v211 = vrot.slane %v170, %v210
    %v212 = vmul.f32 %v211, %v26
    %v213 = vadd.f32 %v192, %v212
    %v214 = vmul.f32 %v213, 0.5
    %v215 = vtanh.pop %v214
    %v216 = vadd.f32 %v215, 1.0
    %v217 = vmul.f32 %v216, 0.5
    %v218 = vtanh.pop %v213
    %v219 = vmul.f32 %v217, %v165
    %v221 = vrot.slane %v218, 2
    %v223 = vmul.f32 %v217, %v221
    %v225 = vrot.slane %v223, 7
    %v227 = vadd.f32 %v219, %v225
    %v228 = vtanh.pop %v227
    %v230 = vrot.slane %v228, 6
    %v232 = vmul.f32 %v217, %v230
    %233 = vst.msk [vmem:[#allocation2 - $0x2] sm:$0x8] %vm171, %v232
    %v234 = vrot.slane %v104, 2
    %v235 = vrot.slane %v109, 1
    %v236 = vsel %vm115, %v235, %v234
    %238 = vxpose.xlu0.b32.start [1/16] %v236, 128
    %239 = vxpose.xlu0.b32.cont [2/16] 0.0, 128
    %240 = vxpose.xlu0.b32.cont [3/16] 0.0, 128
    %241 = vxpose.xlu0.b32.cont [4/16] 0.0, 128
    %242 = vxpose.xlu0.b32.cont [5/16] 0.0, 128
    %243 = vxpose.xlu0.b32.cont [6/16] 0.0, 128
    %244 = vxpose.xlu0.b32.cont [7/16] 0.0, 128
    %245 = vxpose.xlu0.b32.cont [8/16] 0.0, 128
    %246 = vxpose.xlu0.b32.cont [9/16] 0.0, 128
    %247 = vxpose.xlu0.b32.cont [10/16] 0.0, 128
    %248 = vxpose.xlu0.b32.cont [11/16] 0.0, 128
    %249 = vxpose.xlu0.b32.cont [12/16] 0.0, 128
    %250 = vxpose.xlu0.b32.cont [13/16] 0.0, 128
    %251 = vxpose.xlu0.b32.cont [14/16] 0.0, 128
    %252 = vxpose.xlu0.b32.cont [15/16] 0.0, 128
    %253 = vxpose.xlu0.b32.end [16/16] 0.0, 128
    %v254 = vpop.trf.xlu0
    %v255 = vpop.trf.xlu0
    %v256 = vpop.trf.xlu0
    %v257 = vpop.trf.xlu0
    %v258 = vpop.trf.xlu0
    %v259 = vpop.trf.xlu0
    %v260 = vpop.trf.xlu0
    %v261 = vpop.trf.xlu0
    %v262 = vpop.trf.xlu0
    %v263 = vpop.trf.xlu0
    %v264 = vpop.trf.xlu0
    %v265 = vpop.trf.xlu0
    %v266 = vpop.trf.xlu0
    %v267 = vpop.trf.xlu0
    %v268 = vpop.trf.xlu0
    %v269 = vpop.trf.xlu0
    %v270 = vlaneseq
    %v271 = vshrl.u32 %v270, 7
    %v272 = vsub.s32 3, %v271
    %v273 = vrot.slane %v232, %v272
    %v274 = vmul.f32 %v273, %v26
    %v275 = vadd.f32 %v254, %v274
    %v276 = vmul.f32 %v275, 0.5
    %v277 = vtanh.pop %v276
    %v278 = vadd.f32 %v277, 1.0
    %v279 = vmul.f32 %v278, 0.5
    %v280 = vtanh.pop %v275
    %v281 = vmul.f32 %v279, %v227
    %v283 = vrot.slane %v280, 2
    %v285 = vmul.f32 %v279, %v283
    %v287 = vrot.slane %v285, 7
    %v289 = vadd.f32 %v281, %v287
    %v290 = vtanh.pop %v289
    %v292 = vrot.slane %v290, 6
    %v294 = vmul.f32 %v279, %v292
    %295 = vst.msk [vmem:[#allocation2 - $0x1] sm:$0x8] %vm171, %v294
    %v296 = vrot.slane %v104, 3
    %v297 = vrot.slane %v109, 2
    %v298 = vsel %vm115, %v297, %v296
    %300 = vxpose.xlu0.b32.start [1/16] %v298, 128
    %301 = vxpose.xlu0.b32.cont [2/16] 0.0, 128
    %302 = vxpose.xlu0.b32.cont [3/16] 0.0, 128
    %303 = vxpose.xlu0.b32.cont [4/16] 0.0, 128
    %304 = vxpose.xlu0.b32.cont [5/16] 0.0, 128
    %305 = vxpose.xlu0.b32.cont [6/16] 0.0, 128
    %306 = vxpose.xlu0.b32.cont [7/16] 0.0, 128
    %307 = vxpose.xlu0.b32.cont [8/16] 0.0, 128
    %308 = vxpose.xlu0.b32.cont [9/16] 0.0, 128
    %309 = vxpose.xlu0.b32.cont [10/16] 0.0, 128
    %310 = vxpose.xlu0.b32.cont [11/16] 0.0, 128
    %311 = vxpose.xlu0.b32.cont [12/16] 0.0, 128
    %312 = vxpose.xlu0.b32.cont [13/16] 0.0, 128
    %313 = vxpose.xlu0.b32.cont [14/16] 0.0, 128
    %314 = vxpose.xlu0.b32.cont [15/16] 0.0, 128
    %315 = vxpose.xlu0.b32.end [16/16] 0.0, 128
    %v316 = vpop.trf.xlu0
    %v317 = vpop.trf.xlu0
    %v318 = vpop.trf.xlu0
    %v319 = vpop.trf.xlu0
    %v320 = vpop.trf.xlu0
    %v321 = vpop.trf.xlu0
    %v322 = vpop.trf.xlu0
    %v323 = vpop.trf.xlu0
    %v324 = vpop.trf.xlu0
    %v325 = vpop.trf.xlu0
    %v326 = vpop.trf.xlu0
    %v327 = vpop.trf.xlu0
    %v328 = vpop.trf.xlu0
    %v329 = vpop.trf.xlu0
    %v330 = vpop.trf.xlu0
    %v331 = vpop.trf.xlu0
    %v332 = vlaneseq
    %v333 = vshrl.u32 %v332, 7
    %v334 = vsub.s32 3, %v333
    %v335 = vrot.slane %v294, %v334
    %v336 = vmul.f32 %v335, %v26
    %v337 = vadd.f32 %v316, %v336
    %v338 = vmul.f32 %v337, 0.5
    %v339 = vtanh.pop %v338
    %v340 = vadd.f32 %v339, 1.0
    %v341 = vmul.f32 %v340, 0.5
    %v342 = vtanh.pop %v337
    %v343 = vmul.f32 %v341, %v289
    %v345 = vrot.slane %v342, 2
    %v347 = vmul.f32 %v341, %v345
    %v349 = vrot.slane %v347, 7
    %v351 = vadd.f32 %v343, %v349
    %v352 = vtanh.pop %v351
    %v354 = vrot.slane %v352, 6
    %v356 = vmul.f32 %v341, %v354
    %357 = vst.msk [vmem:[#allocation2] sm:$0x8] %vm171, %v356
    %v358 = vrot.slane %v104, 4
    %v359 = vrot.slane %v109, 3
    %v360 = vsel %vm115, %v359, %v358
    %362 = vxpose.xlu0.b32.start [1/16] %v360, 128
    %363 = vxpose.xlu0.b32.cont [2/16] 0.0, 128
    %364 = vxpose.xlu0.b32.cont [3/16] 0.0, 128
    %365 = vxpose.xlu0.b32.cont [4/16] 0.0, 128
    %366 = vxpose.xlu0.b32.cont [5/16] 0.0, 128
    %367 = vxpose.xlu0.b32.cont [6/16] 0.0, 128
    %368 = vxpose.xlu0.b32.cont [7/16] 0.0, 128
    %369 = vxpose.xlu0.b32.cont [8/16] 0.0, 128
    %370 = vxpose.xlu0.b32.cont [9/16] 0.0, 128
    %371 = vxpose.xlu0.b32.cont [10/16] 0.0, 128
    %372 = vxpose.xlu0.b32.cont [11/16] 0.0, 128
    %373 = vxpose.xlu0.b32.cont [12/16] 0.0, 128
    %374 = vxpose.xlu0.b32.cont [13/16] 0.0, 128
    %375 = vxpose.xlu0.b32.cont [14/16] 0.0, 128
    %376 = vxpose.xlu0.b32.cont [15/16] 0.0, 128
    %377 = vxpose.xlu0.b32.end [16/16] 0.0, 128
    %v378 = vpop.trf.xlu0
    %v379 = vpop.trf.xlu0
    %v380 = vpop.trf.xlu0
    %v381 = vpop.trf.xlu0
    %v382 = vpop.trf.xlu0
    %v383 = vpop.trf.xlu0
    %v384 = vpop.trf.xlu0
    %v385 = vpop.trf.xlu0
    %v386 = vpop.trf.xlu0
    %v387 = vpop.trf.xlu0
    %v388 = vpop.trf.xlu0
    %v389 = vpop.trf.xlu0
    %v390 = vpop.trf.xlu0
    %v391 = vpop.trf.xlu0
    %v392 = vpop.trf.xlu0
    %v393 = vpop.trf.xlu0
    %v394 = vlaneseq
    %v395 = vshrl.u32 %v394, 7
    %v396 = vsub.s32 3, %v395
    %v397 = vrot.slane %v356, %v396
    %v398 = vmul.f32 %v397, %v26
    %v399 = vadd.f32 %v378, %v398
    %v400 = vmul.f32 %v399, 0.5
    %v401 = vtanh.pop %v400
    %v402 = vadd.f32 %v401, 1.0
    %v403 = vmul.f32 %v402, 0.5
    %v404 = vtanh.pop %v399
    %v405 = vmul.f32 %v403, %v351
    %v407 = vrot.slane %v404, 2
    %v409 = vmul.f32 %v403, %v407
    %v411 = vrot.slane %v409, 7
    %v413 = vadd.f32 %v405, %v411
    %v414 = vtanh.pop %v413
    %v416 = vrot.slane %v414, 6
    %v418 = vmul.f32 %v403, %v416
    %419 = vst.msk [vmem:[#allocation2 + $0x1] sm:$0x8] %vm171, %v418
    %v420 = vrot.slane %v104, 5
    %v421 = vrot.slane %v109, 4
    %v422 = vsel %vm115, %v421, %v420
    %424 = vxpose.xlu0.b32.start [1/16] %v422, 128
    %425 = vxpose.xlu0.b32.cont [2/16] 0.0, 128
    %426 = vxpose.xlu0.b32.cont [3/16] 0.0, 128
    %427 = vxpose.xlu0.b32.cont [4/16] 0.0, 128
    %428 = vxpose.xlu0.b32.cont [5/16] 0.0, 128
    %429 = vxpose.xlu0.b32.cont [6/16] 0.0, 128
    %430 = vxpose.xlu0.b32.cont [7/16] 0.0, 128
    %431 = vxpose.xlu0.b32.cont [8/16] 0.0, 128
    %432 = vxpose.xlu0.b32.cont [9/16] 0.0, 128
    %433 = vxpose.xlu0.b32.cont [10/16] 0.0, 128
    %434 = vxpose.xlu0.b32.cont [11/16] 0.0, 128
    %435 = vxpose.xlu0.b32.cont [12/16] 0.0, 128
    %436 = vxpose.xlu0.b32.cont [13/16] 0.0, 128
    %437 = vxpose.xlu0.b32.cont [14/16] 0.0, 128
    %438 = vxpose.xlu0.b32.cont [15/16] 0.0, 128
    %439 = vxpose.xlu0.b32.end [16/16] 0.0, 128
    %v440 = vpop.trf.xlu0
    %v441 = vpop.trf.xlu0
    %v442 = vpop.trf.xlu0
    %v443 = vpop.trf.xlu0
    %v444 = vpop.trf.xlu0
    %v445 = vpop.trf.xlu0
    %v446 = vpop.trf.xlu0
    %v447 = vpop.trf.xlu0
    %v448 = vpop.trf.xlu0
    %v449 = vpop.trf.xlu0
    %v450 = vpop.trf.xlu0
    %v451 = vpop.trf.xlu0
    %v452 = vpop.trf.xlu0
    %v453 = vpop.trf.xlu0
    %v454 = vpop.trf.xlu0
    %v455 = vpop.trf.xlu0
    %v456 = vlaneseq
    %v457 = vshrl.u32 %v456, 7
    %v458 = vsub.s32 3, %v457
    %v459 = vrot.slane %v418, %v458
    %v460 = vmul.f32 %v459, %v26
    %v461 = vadd.f32 %v440, %v460
    %v462 = vmul.f32 %v461, 0.5
    %v463 = vtanh.pop %v462
    %v464 = vadd.f32 %v463, 1.0
    %v465 = vmul.f32 %v464, 0.5
    %v466 = vtanh.pop %v461
    %v467 = vmul.f32 %v465, %v413
    %v469 = vrot.slane %v466, 2
    %v471 = vmul.f32 %v465, %v469
    %v473 = vrot.slane %v471, 7
    %v475 = vadd.f32 %v467, %v473
    %v476 = vtanh.pop %v475
    %v478 = vrot.slane %v476, 6
    %v480 = vmul.f32 %v465, %v478
    %481 = vst.msk [vmem:[#allocation2 + $0x2] sm:$0x8] %vm171, %v480
    %v482 = vrot.slane %v104, 6
    %v483 = vrot.slane %v109, 5
    %v484 = vsel %vm115, %v483, %v482
    %486 = vxpose.xlu0.b32.start [1/16] %v484, 128
    %487 = vxpose.xlu0.b32.cont [2/16] 0.0, 128
    %488 = vxpose.xlu0.b32.cont [3/16] 0.0, 128
    %489 = vxpose.xlu0.b32.cont [4/16] 0.0, 128
    %490 = vxpose.xlu0.b32.cont [5/16] 0.0, 128
    %491 = vxpose.xlu0.b32.cont [6/16] 0.0, 128
    %492 = vxpose.xlu0.b32.cont [7/16] 0.0, 128
    %493 = vxpose.xlu0.b32.cont [8/16] 0.0, 128
    %494 = vxpose.xlu0.b32.cont [9/16] 0.0, 128
    %495 = vxpose.xlu0.b32.cont [10/16] 0.0, 128
    %496 = vxpose.xlu0.b32.cont [11/16] 0.0, 128
    %497 = vxpose.xlu0.b32.cont [12/16] 0.0, 128
    %498 = vxpose.xlu0.b32.cont [13/16] 0.0, 128
    %499 = vxpose.xlu0.b32.cont [14/16] 0.0, 128
    %500 = vxpose.xlu0.b32.cont [15/16] 0.0, 128
    %501 = vxpose.xlu0.b32.end [16/16] 0.0, 128
    %v502 = vpop.trf.xlu0
    %v503 = vpop.trf.xlu0
    %v504 = vpop.trf.xlu0
    %v505 = vpop.trf.xlu0
    %v506 = vpop.trf.xlu0
    %v507 = vpop.trf.xlu0
    %v508 = vpop.trf.xlu0
    %v509 = vpop.trf.xlu0
    %v510 = vpop.trf.xlu0
    %v511 = vpop.trf.xlu0
    %v512 = vpop.trf.xlu0
    %v513 = vpop.trf.xlu0
    %v514 = vpop.trf.xlu0
    %v515 = vpop.trf.xlu0
    %v516 = vpop.trf.xlu0
    %v517 = vpop.trf.xlu0
    %v518 = vlaneseq
    %v519 = vshrl.u32 %v518, 7
    %v520 = vsub.s32 3, %v519
    %v521 = vrot.slane %v480, %v520
    %v522 = vmul.f32 %v521, %v26
    %v523 = vadd.f32 %v502, %v522
    %v524 = vmul.f32 %v523, 0.5
    %v525 = vtanh.pop %v524
    %v526 = vadd.f32 %v525, 1.0
    %v527 = vmul.f32 %v526, 0.5
    %v528 = vtanh.pop %v523
    %v529 = vmul.f32 %v527, %v475
    %v531 = vrot.slane %v528, 2
    %v533 = vmul.f32 %v527, %v531
    %v535 = vrot.slane %v533, 7
    %v537 = vadd.f32 %v529, %v535
    %v538 = vtanh.pop %v537
    %v540 = vrot.slane %v538, 6
    %v542 = vmul.f32 %v527, %v540
    %543 = vst.msk [vmem:[#allocation2 + $0x3] sm:$0x8] %vm171, %v542
    %v544 = vrot.slane %v104, 7
    %v545 = vrot.slane %v109, 6
    %v546 = vsel %vm115, %v545, %v544
    %548 = vxpose.xlu0.b32.start [1/16] %v546, 128
    %549 = vxpose.xlu0.b32.cont [2/16] 0.0, 128
    %550 = vxpose.xlu0.b32.cont [3/16] 0.0, 128
    %551 = vxpose.xlu0.b32.cont [4/16] 0.0, 128
    %552 = vxpose.xlu0.b32.cont [5/16] 0.0, 128
    %553 = vxpose.xlu0.b32.cont [6/16] 0.0, 128
    %554 = vxpose.xlu0.b32.cont [7/16] 0.0, 128
    %555 = vxpose.xlu0.b32.cont [8/16] 0.0, 128
    %556 = vxpose.xlu0.b32.cont [9/16] 0.0, 128
    %557 = vxpose.xlu0.b32.cont [10/16] 0.0, 128
    %558 = vxpose.xlu0.b32.cont [11/16] 0.0, 128
    %559 = vxpose.xlu0.b32.cont [12/16] 0.0, 128
    %560 = vxpose.xlu0.b32.cont [13/16] 0.0, 128
    %561 = vxpose.xlu0.b32.cont [14/16] 0.0, 128
    %562 = vxpose.xlu0.b32.cont [15/16] 0.0, 128
    %563 = vxpose.xlu0.b32.end [16/16] 0.0, 128
    %v564 = vpop.trf.xlu0
    %v565 = vpop.trf.xlu0
    %v566 = vpop.trf.xlu0
    %v567 = vpop.trf.xlu0
    %v568 = vpop.trf.xlu0
    %v569 = vpop.trf.xlu0
    %v570 = vpop.trf.xlu0
    %v571 = vpop.trf.xlu0
    %v572 = vpop.trf.xlu0
    %v573 = vpop.trf.xlu0
    %v574 = vpop.trf.xlu0
    %v575 = vpop.trf.xlu0
    %v576 = vpop.trf.xlu0
    %v577 = vpop.trf.xlu0
    %v578 = vpop.trf.xlu0
    %v579 = vpop.trf.xlu0
    %v580 = vlaneseq
    %v581 = vshrl.u32 %v580, 7
    %v582 = vsub.s32 3, %v581
    %v583 = vrot.slane %v542, %v582
    %v584 = vmul.f32 %v583, %v26
    %v585 = vadd.f32 %v564, %v584
    %v586 = vmul.f32 %v585, 0.5
    %v587 = vtanh.pop %v586
    %v588 = vadd.f32 %v587, 1.0
    %v589 = vmul.f32 %v588, 0.5
    %v590 = vtanh.pop %v585
    %v591 = vmul.f32 %v589, %v537
    %v593 = vrot.slane %v590, 2
    %v595 = vmul.f32 %v589, %v593
    %v597 = vrot.slane %v595, 7
    %v599 = vadd.f32 %v591, %v597
    %v600 = vtanh.pop %v599
    %v602 = vrot.slane %v600, 6
    %v604 = vmul.f32 %v589, %v602
    %605 = vst.msk [vmem:[#allocation2 + $0x4] sm:$0x8] %vm171, %v604
    %v606 = vld [vmem:[#allocation2] sm:$0xff]
    %607 = vxpose.xlu0.b32.start [1/16] %v606, 128
    %608 = vxpose.xlu0.b32.cont [2/16] 0.0, 128
    %609 = vxpose.xlu0.b32.cont [3/16] 0.0, 128
    %610 = vxpose.xlu0.b32.cont [4/16] 0.0, 128
    %611 = vxpose.xlu0.b32.cont [5/16] 0.0, 128
    %612 = vxpose.xlu0.b32.cont [6/16] 0.0, 128
    %613 = vxpose.xlu0.b32.cont [7/16] 0.0, 128
    %614 = vxpose.xlu0.b32.cont [8/16] 0.0, 128
    %615 = vxpose.xlu0.b32.cont [9/16] 0.0, 128
    %616 = vxpose.xlu0.b32.cont [10/16] 0.0, 128
    %617 = vxpose.xlu0.b32.cont [11/16] 0.0, 128
    %618 = vxpose.xlu0.b32.cont [12/16] 0.0, 128
    %619 = vxpose.xlu0.b32.cont [13/16] 0.0, 128
    %620 = vxpose.xlu0.b32.cont [14/16] 0.0, 128
    %621 = vxpose.xlu0.b32.cont [15/16] 0.0, 128
    %622 = vxpose.xlu0.b32.end [16/16] 0.0, 128
    %v623 = vpop.trf.xlu0
    %v624 = vpop.trf.xlu0
    %v625 = vpop.trf.xlu0
    %v626 = vpop.trf.xlu0
    %v627 = vpop.trf.xlu0
    %v628 = vpop.trf.xlu0
    %v629 = vpop.trf.xlu0
    %v630 = vpop.trf.xlu0
    %v631 = vpop.trf.xlu0
    %v632 = vpop.trf.xlu0
    %v633 = vpop.trf.xlu0
    %v634 = vpop.trf.xlu0
    %v635 = vpop.trf.xlu0
    %v636 = vpop.trf.xlu0
    %v637 = vpop.trf.xlu0
    %v638 = vpop.trf.xlu0
    %v639 = vld [vmem:[%s0] sm:$0x3]
    %v640 = vlaneseq
    %v641 = vand.u32 %v640, 127
    %642 = vset.pattern.permute.xlu0 0
    %643 = vperm.xlu0 %642, %v639
    %v644 = vpop.permute.xlu0 %643
    %vm645 = vcmp.ge.s32.totalorder %v641, %v644
    %v646 = vsel %vm645, -1e+30, %v623
    %vm647 = vcmask 58368
    %v648 = vsel %vm647, %v646, -inf
    %649 = vmax.xlane.f32.xlu0 %v648
    %v650 = vpop.xlane.xlu0 %649
    %v651 = vsub.f32 %v646, %v650
    %v652 = vmul.f32 %v651, 1.442695
    %v653 = vpow.pop %v652
    %v654 = vsel %vm647, %v653, 0.0
    %655 = vadd.xlane.f32.xlu0 %v654
    %v656 = vpop.xlane.xlu0 %655
    %v657 = vrcp.pop %v656
    %v658 = vmul.f32 %v653, %v657
    %v659 = vld [vmem:[%s1] sm:$0xff]
    %v660 = vld [vmem:[%s1 + $0x8] sm:$0xff]
    %v661 = vlaneseq
    %v662 = vshrl.u32 %v661, 7
    %v663 = vsub.s32 0, %v662
    %v664 = vrot.slane %v658, %v663
    %666 = vbcast.lane.b32.xlu0 %v664, 256
    %v667 = vpop.permute.xlu0 %666
    %v668 = vlaneseq
    %v669 = vshrl.u32 %v668, 7
    %v670 = vsub.s32 1, %v669
    %v671 = vrot.slane %v658, %v670
    %673 = vbcast.lane.b32.xlu0 %v671, 256
    %v674 = vpop.permute.xlu0 %673
    %v675 = vmul.f32 %v659, %v667
    %v676 = vmul.f32 %v660, %v674
    %677 = vst.msk [vmem:[#allocation3] sm:$0xff] %vm30, %v675
    %678 = vst.msk [vmem:[#allocation3 + $0x8] sm:$0xff] %vm30, %v676
    // Predicated region
    $region18: #{tpu_custom_call.1} parent=1 // pred_check
      _
    $region19: #{tpu_custom_call.1} parent=1 // pred_check_branch
      %680 = sbr.rel (0) target = $region21
    $region20: #{tpu_custom_call.1} parent=1 // pred_region
      %s682 = ssub.s32 256, 256
      %683 = vsyncadd [#allocation4], %s682
      %s684 = sshll.u32 [#allocation3], 4
      %s685 = int_to_ptr.vmem [resolvable:$true] %s684
      %690 = dma.vmem_to_hbm [thread:$0]  %s685, 256, %s4, [#allocation4], 128, 128, 8
    $region21: #{tpu_custom_call.1} parent=1 // pred_fallthru
      _
    // Predicated region
    $region22: #{tpu_custom_call.1} parent=1 // pred_check
      _
    $region23: #{tpu_custom_call.1} parent=1 // pred_check_branch
      %692 = sbr.rel (0) target = $region25
    $region24: #{tpu_custom_call.1} parent=1 // pred_region
      %693 = dma.done [#allocation4], 256
    $region25: #{tpu_custom_call.1} parent=1 // pred_fallthru
      _
    %694 = vsyncpa [#allocation4], 1

</llo_original>
